<compile_context>
chip_gen: v5e
topology: v5e:2x2
jax: 0.10.0
libtpu: 0.0.40
codegen_flags: <defaults>
</compile_context>

<pallas_src>
import jax
import jax.numpy as jnp
from jax.experimental import pallas as pl
from jax.experimental.pallas import tpu as pltpu


# ----------------------------------------------------------------------------
# Inner-module dimensions (deterministic synthetic module)
# ----------------------------------------------------------------------------
B, CIN, H, W = 2, 4, 16, 16
COUT, KH, KW = 8, 3, 3
NUM_CLASSES = 10
CK = CIN * KH * KW            # 36  (im2col contraction dim of the conv)
P = H * W                     # 256 (spatial positions per image)
FLAT_FEATS = COUT * H * W     # 2048


# ----------------------------------------------------------------------------
# Fused Pallas kernel: conv(as matmul)+bias+ReLU -> linear+bias, per batch elem
# ----------------------------------------------------------------------------
def _fused_forward_kernel(patches_ref, convw_ref, convb_ref, fcw_ref, fcb_ref,
                          out_ref):
    # --- conv as matmul, transposed so the activation is lane-dense -------
    # [COUT, CK] @ [CK, P] -> [COUT, P] = [8, 256]  (2 lane-dense vregs)
    act = jnp.dot(convw_ref[...], patches_ref[0],
                  preferred_element_type=jnp.float32)
    act = jnp.maximum(act + convb_ref[...], 0.0)      # bias [8,1] bcast + ReLU

    # --- linear layer, contracted per conv channel ------------------------
    # logits = sum_c  act[c, :] @ fcw[c]   with act[c,:]: [1, P], fcw[c]: [P, N]
    # (equivalent to the PyTorch flatten(NCHW) @ fc_w.T, but avoids any
    #  in-kernel sublane->lane flatten/relayout of the activation)
    acc = jnp.dot(act[0:1, :], fcw_ref[0], preferred_element_type=jnp.float32)
    for c in range(1, COUT):
        acc = acc + jnp.dot(act[c:c + 1, :], fcw_ref[c],
                            preferred_element_type=jnp.float32)

    out_ref[0] = (acc + fcb_ref[...]).astype(out_ref.dtype)   # [1, NUM_CLASSES]


def _cost_estimate(batch):
    conv_flops = 2 * batch * COUT * CK * P
    fc_flops = 2 * batch * FLAT_FEATS * NUM_CLASSES
    bytes_accessed = 4 * (batch * CK * P          # patches
                          + COUT * CK + COUT      # conv weights + bias
                          + FLAT_FEATS * NUM_CLASSES + NUM_CLASSES  # fc
                          + batch * NUM_CLASSES)  # logits
    return pl.CostEstimate(flops=conv_flops + fc_flops,
                           transcendentals=0,
                           bytes_accessed=bytes_accessed)


@jax.jit
def _fused_forward(x, convw_mat, convb_col, fcw3, fcb_row):
    """Whole forward pass: jit-fused im2col glue + one fused Pallas kernel."""
    batch = x.shape[0]

    # im2col, emitted directly in the kernel-friendly [B, CK, P] layout
    # (CK index = c*KH*KW + i*KW + j, matching conv_w.reshape(COUT, CK)).
    xp = jnp.pad(x, ((0, 0), (0, 0), (1, 1), (1, 1)))
    patch_list = [xp[:, :, i:i + H, j:j + W] for i in range(KH) for j in range(KW)]
    patches = jnp.stack(patch_list, axis=2).reshape(batch, CK, P)

    out = pl.pallas_call(
        _fused_forward_kernel,
        out_shape=jax.ShapeDtypeStruct((batch, 1, NUM_CLASSES), jnp.float32),
        grid=(batch,),
        in_specs=[
            pl.BlockSpec((1, CK, P), lambda b: (b, 0, 0)),          # patches
            pl.BlockSpec((COUT, CK), lambda b: (0, 0)),             # conv W
            pl.BlockSpec((COUT, 1), lambda b: (0, 0)),              # conv b
            pl.BlockSpec((COUT, P, NUM_CLASSES), lambda b: (0, 0, 0)),  # fc W
            pl.BlockSpec((1, NUM_CLASSES), lambda b: (0, 0)),       # fc b
        ],
        out_specs=pl.BlockSpec((1, 1, NUM_CLASSES), lambda b: (b, 0, 0)),
        compiler_params=pltpu.CompilerParams(
            dimension_semantics=("parallel",)),  # v7x: one batch elem per TC
        cost_estimate=_cost_estimate(batch),
    )(patches, convw_mat, convb_col, fcw3, fcb_row)

    return out.reshape(batch, NUM_CLASSES)


# ----------------------------------------------------------------------------
# Parameter flattening, mirroring flatten_tensors / assign_unflattened_tensors
# ----------------------------------------------------------------------------
def make_inner_params():
    """Deterministic parameter init (shapes follow the PyTorch module)."""
    key = jax.random.PRNGKey(0)
    k1, k2, k3, k4 = jax.random.split(key, 4)
    conv_w = jax.random.normal(k1, (COUT, CIN, KH, KW), jnp.float32) * 0.1
    conv_b = jax.random.normal(k2, (COUT,), jnp.float32) * 0.1
    fc_w = jax.random.normal(k3, (NUM_CLASSES, FLAT_FEATS), jnp.float32) * 0.02
    fc_b = jax.random.normal(k4, (NUM_CLASSES,), jnp.float32) * 0.02
    return [conv_w, conv_b, fc_w, fc_b]


def flatten_tensors(params):
    """Equivalent of flatten_tensors(): concat of flattened parameters."""
    return jnp.concatenate([p.reshape(-1) for p in params], axis=0)


def assign_unflattened_tensors(flat, param_info):
    """Slice the flat buffer back into per-parameter views (static slices)."""
    out, off = [], 0
    for info in param_info:
        n, shp = info["numel"], info["shape"]
        out.append(flat[off:off + n].reshape(shp))
        off += n
    return out


class ModelWrapper:
    """JAX analogue of the BEER ModelWrapper: parameters live in a flat buffer;
    kernel-layout views are refreshed from it (the analogue of re-assigning
    unflattened views to module parameters)."""

    def __init__(self, params):
        self.param_info = [{"numel": int(p.size), "shape": p.shape} for p in params]
        self.flat_parameters = flatten_tensors(params)
        self.training = True
        self.assign_unflattened_tensors_to_parameters()

    def assign_unflattened_tensors_to_parameters(self):
        """Refresh cached, kernel-friendly weight layouts from the flat buffer.
        Call after mutating self.flat_parameters (mirrors the PyTorch method)."""
        conv_w, conv_b, fc_w, fc_b = assign_unflattened_tensors(
            self.flat_parameters, self.param_info)
        # Hoisted one-time layout work (not per forward call):
        self._convw_mat = conv_w.reshape(COUT, CK)                    # [8, 36]
        self._convb_col = conv_b.reshape(COUT, 1)                     # [8, 1]
        # fcw3[c, p, n] = fc_w[n, c*P + p]  -> per-channel [P, N] slabs
        self._fcw3 = fc_w.reshape(NUM_CLASSES, COUT, P).transpose(1, 2, 0)
        self._fcb_row = fc_b.reshape(1, NUM_CLASSES)                  # [1, 10]

    def eval(self):
        self.training = False  # no dropout/BN in the inner module
        return self

    def train(self):
        self.training = True
        return self

    def zero_(self):
        self.flat_parameters = jnp.zeros_like(self.flat_parameters)
        self.assign_unflattened_tensors_to_parameters()

    # TODO(synk): zero_grad() has no meaning without a PyTorch autograd graph.

    def forward(self, x):
        return _fused_forward(x, self._convw_mat, self._convb_col,
                              self._fcw3, self._fcb_row)

    __call__ = forward


if __name__ == "__main__":
    params = make_inner_params()
    wrapper = ModelWrapper(params)

    key = jax.random.PRNGKey(0)
    x = jax.random.normal(key, (B, CIN, H, W), jnp.float32)  # NCHW input

    out = wrapper(x)
    jax.block_until_ready(out)
    assert out.shape == (B, NUM_CLASSES) and out.dtype == jnp.float32

    # Cross-check the fused Pallas path against a plain-JAX reference.
    conv_w, conv_b, fc_w, fc_b = params
    ref = jax.lax.conv_general_dilated(
        x, conv_w, window_strides=(1, 1), padding="SAME",
        dimension_numbers=("NCHW", "OIHW", "NCHW"),
    ) + conv_b[None, :, None, None]
    ref = jnp.maximum(ref, 0.0).reshape(B, FLAT_FEATS) @ fc_w.T + fc_b
    assert jnp.allclose(out, ref, atol=1e-4, rtol=1e-4)

    print("KERNEL_OK")
</pallas_src>

<mosaic_0001>
module attributes {stable_mosaic.version = 11 : i64} {
  func.func @_fused_forward_kernel(%arg0: i32, %arg1: memref<1x36x256xf32, #tpu.memory_space<vmem>>, %arg2: memref<8x36xf32, #tpu.memory_space<vmem>>, %arg3: memref<8x1xf32, #tpu.memory_space<vmem>>, %arg4: memref<8x256x10xf32, #tpu.memory_space<vmem>>, %arg5: memref<1x10xf32, #tpu.memory_space<vmem>>, %arg6: memref<1x1x10xf32, #tpu.memory_space<vmem>>) attributes {dimension_semantics = [#tpu.dimension_semantics<parallel>], iteration_bounds = array<i64: 2>, scalar_prefetch = 0 : i64, scratch_operands = 0 : i64, tpu.core_type = #tpu.core_type<tc>, window_params = [{transform_indices = @transform_0, window_bounds = array<i64: 1, 36, 256>}, {pipeline_mode = #tpu.pipeline_mode<synchronous>, transform_indices = @transform_1, window_bounds = array<i64: 8, 36>}, {pipeline_mode = #tpu.pipeline_mode<synchronous>, transform_indices = @transform_2, window_bounds = array<i64: 8, 1>}, {pipeline_mode = #tpu.pipeline_mode<synchronous>, transform_indices = @transform_3, window_bounds = array<i64: 8, 256, 10>}, {pipeline_mode = #tpu.pipeline_mode<synchronous>, transform_indices = @transform_4, window_bounds = array<i64: 1, 10>}, {transform_indices = @transform_5, window_bounds = array<i64: 1, 1, 10>}]} {
    %c0 = arith.constant 0 : index
    %c0_0 = arith.constant 0 : index
    %0 = vector.load %arg2[%c0, %c0_0] : memref<8x36xf32, #tpu.memory_space<vmem>>, vector<8x36xf32>
    %c0_1 = arith.constant 0 : index
    %c0_2 = arith.constant 0 : index
    %c0_3 = arith.constant 0 : index
    %1 = vector.load %arg1[%c0_1, %c0_2, %c0_3] : memref<1x36x256xf32, #tpu.memory_space<vmem>>, vector<1x36x256xf32>
    %2 = vector.shape_cast %1 : vector<1x36x256xf32> to vector<36x256xf32>
    %cst = arith.constant dense<0.000000e+00> : vector<8x256xf32>
    %3 = tpu.matmul %0, %2, %cst {dimension_numbers = #tpu.dot_dimension_numbers<[1], [0], [0], [1], [0, 0, 1, 1], [], []>} : vector<8x36xf32>, vector<36x256xf32>, vector<8x256xf32> -> vector<8x256xf32>
    %c0_4 = arith.constant 0 : index
    %c0_5 = arith.constant 0 : index
    %4 = vector.load %arg3[%c0_4, %c0_5] : memref<8x1xf32, #tpu.memory_space<vmem>>, vector<8x1xf32>
    %5 = vector.broadcast %4 : vector<8x1xf32> to vector<8x256xf32>
    %6 = arith.addf %3, %5 : vector<8x256xf32>
    %cst_6 = arith.constant 0.000000e+00 : f32
    %7 = vector.broadcast %cst_6 : f32 to vector<8x256xf32>
    %8 = arith.maximumf %6, %7 : vector<8x256xf32>
    %9 = vector.extract_strided_slice %8 {offsets = [0, 0], sizes = [1, 256], strides = [1, 1]} : vector<8x256xf32> to vector<1x256xf32>
    %c0_7 = arith.constant 0 : index
    %c0_8 = arith.constant 0 : index
    %c0_9 = arith.constant 0 : index
    %10 = vector.load %arg4[%c0_7, %c0_8, %c0_9] : memref<8x256x10xf32, #tpu.memory_space<vmem>>, vector<1x256x10xf32>
    %11 = vector.shape_cast %10 : vector<1x256x10xf32> to vector<256x10xf32>
    %cst_10 = arith.constant dense<0.000000e+00> : vector<1x10xf32>
    %12 = tpu.matmul %9, %11, %cst_10 {dimension_numbers = #tpu.dot_dimension_numbers<[1], [0], [0], [1], [0, 0, 1, 1], [], []>} : vector<1x256xf32>, vector<256x10xf32>, vector<1x10xf32> -> vector<1x10xf32>
    %13 = vector.extract_strided_slice %8 {offsets = [1, 0], sizes = [1, 256], strides = [1, 1]} : vector<8x256xf32> to vector<1x256xf32>
    %c1 = arith.constant 1 : index
    %c0_11 = arith.constant 0 : index
    %c0_12 = arith.constant 0 : index
    %14 = vector.load %arg4[%c1, %c0_11, %c0_12] : memref<8x256x10xf32, #tpu.memory_space<vmem>>, vector<1x256x10xf32>
    %15 = vector.shape_cast %14 : vector<1x256x10xf32> to vector<256x10xf32>
    %cst_13 = arith.constant dense<0.000000e+00> : vector<1x10xf32>
    %16 = tpu.matmul %13, %15, %cst_13 {dimension_numbers = #tpu.dot_dimension_numbers<[1], [0], [0], [1], [0, 0, 1, 1], [], []>} : vector<1x256xf32>, vector<256x10xf32>, vector<1x10xf32> -> vector<1x10xf32>
    %17 = arith.addf %12, %16 : vector<1x10xf32>
    %18 = vector.extract_strided_slice %8 {offsets = [2, 0], sizes = [1, 256], strides = [1, 1]} : vector<8x256xf32> to vector<1x256xf32>
    %c2 = arith.constant 2 : index
    %c0_14 = arith.constant 0 : index
    %c0_15 = arith.constant 0 : index
    %19 = vector.load %arg4[%c2, %c0_14, %c0_15] : memref<8x256x10xf32, #tpu.memory_space<vmem>>, vector<1x256x10xf32>
    %20 = vector.shape_cast %19 : vector<1x256x10xf32> to vector<256x10xf32>
    %cst_16 = arith.constant dense<0.000000e+00> : vector<1x10xf32>
    %21 = tpu.matmul %18, %20, %cst_16 {dimension_numbers = #tpu.dot_dimension_numbers<[1], [0], [0], [1], [0, 0, 1, 1], [], []>} : vector<1x256xf32>, vector<256x10xf32>, vector<1x10xf32> -> vector<1x10xf32>
    %22 = arith.addf %17, %21 : vector<1x10xf32>
    %23 = vector.extract_strided_slice %8 {offsets = [3, 0], sizes = [1, 256], strides = [1, 1]} : vector<8x256xf32> to vector<1x256xf32>
    %c3 = arith.constant 3 : index
    %c0_17 = arith.constant 0 : index
    %c0_18 = arith.constant 0 : index
    %24 = vector.load %arg4[%c3, %c0_17, %c0_18] : memref<8x256x10xf32, #tpu.memory_space<vmem>>, vector<1x256x10xf32>
    %25 = vector.shape_cast %24 : vector<1x256x10xf32> to vector<256x10xf32>
    %cst_19 = arith.constant dense<0.000000e+00> : vector<1x10xf32>
    %26 = tpu.matmul %23, %25, %cst_19 {dimension_numbers = #tpu.dot_dimension_numbers<[1], [0], [0], [1], [0, 0, 1, 1], [], []>} : vector<1x256xf32>, vector<256x10xf32>, vector<1x10xf32> -> vector<1x10xf32>
    %27 = arith.addf %22, %26 : vector<1x10xf32>
    %28 = vector.extract_strided_slice %8 {offsets = [4, 0], sizes = [1, 256], strides = [1, 1]} : vector<8x256xf32> to vector<1x256xf32>
    %c4 = arith.constant 4 : index
    %c0_20 = arith.constant 0 : index
    %c0_21 = arith.constant 0 : index
    %29 = vector.load %arg4[%c4, %c0_20, %c0_21] : memref<8x256x10xf32, #tpu.memory_space<vmem>>, vector<1x256x10xf32>
    %30 = vector.shape_cast %29 : vector<1x256x10xf32> to vector<256x10xf32>
    %cst_22 = arith.constant dense<0.000000e+00> : vector<1x10xf32>
    %31 = tpu.matmul %28, %30, %cst_22 {dimension_numbers = #tpu.dot_dimension_numbers<[1], [0], [0], [1], [0, 0, 1, 1], [], []>} : vector<1x256xf32>, vector<256x10xf32>, vector<1x10xf32> -> vector<1x10xf32>
    %32 = arith.addf %27, %31 : vector<1x10xf32>
    %33 = vector.extract_strided_slice %8 {offsets = [5, 0], sizes = [1, 256], strides = [1, 1]} : vector<8x256xf32> to vector<1x256xf32>
    %c5 = arith.constant 5 : index
    %c0_23 = arith.constant 0 : index
    %c0_24 = arith.constant 0 : index
    %34 = vector.load %arg4[%c5, %c0_23, %c0_24] : memref<8x256x10xf32, #tpu.memory_space<vmem>>, vector<1x256x10xf32>
    %35 = vector.shape_cast %34 : vector<1x256x10xf32> to vector<256x10xf32>
    %cst_25 = arith.constant dense<0.000000e+00> : vector<1x10xf32>
    %36 = tpu.matmul %33, %35, %cst_25 {dimension_numbers = #tpu.dot_dimension_numbers<[1], [0], [0], [1], [0, 0, 1, 1], [], []>} : vector<1x256xf32>, vector<256x10xf32>, vector<1x10xf32> -> vector<1x10xf32>
    %37 = arith.addf %32, %36 : vector<1x10xf32>
    %38 = vector.extract_strided_slice %8 {offsets = [6, 0], sizes = [1, 256], strides = [1, 1]} : vector<8x256xf32> to vector<1x256xf32>
    %c6 = arith.constant 6 : index
    %c0_26 = arith.constant 0 : index
    %c0_27 = arith.constant 0 : index
    %39 = vector.load %arg4[%c6, %c0_26, %c0_27] : memref<8x256x10xf32, #tpu.memory_space<vmem>>, vector<1x256x10xf32>
    %40 = vector.shape_cast %39 : vector<1x256x10xf32> to vector<256x10xf32>
    %cst_28 = arith.constant dense<0.000000e+00> : vector<1x10xf32>
    %41 = tpu.matmul %38, %40, %cst_28 {dimension_numbers = #tpu.dot_dimension_numbers<[1], [0], [0], [1], [0, 0, 1, 1], [], []>} : vector<1x256xf32>, vector<256x10xf32>, vector<1x10xf32> -> vector<1x10xf32>
    %42 = arith.addf %37, %41 : vector<1x10xf32>
    %43 = vector.extract_strided_slice %8 {offsets = [7, 0], sizes = [1, 256], strides = [1, 1]} : vector<8x256xf32> to vector<1x256xf32>
    %c7 = arith.constant 7 : index
    %c0_29 = arith.constant 0 : index
    %c0_30 = arith.constant 0 : index
    %44 = vector.load %arg4[%c7, %c0_29, %c0_30] : memref<8x256x10xf32, #tpu.memory_space<vmem>>, vector<1x256x10xf32>
    %45 = vector.shape_cast %44 : vector<1x256x10xf32> to vector<256x10xf32>
    %cst_31 = arith.constant dense<0.000000e+00> : vector<1x10xf32>
    %46 = tpu.matmul %43, %45, %cst_31 {dimension_numbers = #tpu.dot_dimension_numbers<[1], [0], [0], [1], [0, 0, 1, 1], [], []>} : vector<1x256xf32>, vector<256x10xf32>, vector<1x10xf32> -> vector<1x10xf32>
    %47 = arith.addf %42, %46 : vector<1x10xf32>
    %c0_32 = arith.constant 0 : index
    %c0_33 = arith.constant 0 : index
    %48 = vector.load %arg5[%c0_32, %c0_33] : memref<1x10xf32, #tpu.memory_space<vmem>>, vector<1x10xf32>
    %49 = arith.addf %47, %48 : vector<1x10xf32>
    %c0_34 = arith.constant 0 : index
    %c0_35 = arith.constant 0 : index
    %c0_36 = arith.constant 0 : index
    %50 = vector.load %arg6[%c0_34, %c0_35, %c0_36] : memref<1x1x10xf32, #tpu.memory_space<vmem>>, vector<1x1x10xf32>
    %51 = vector.shape_cast %50 : vector<1x1x10xf32> to vector<1x10xf32>
    %52 = vector.shape_cast %49 : vector<1x10xf32> to vector<1x1x10xf32>
    tpu.vector_store %arg6[%c0_34, %c0_35, %c0_36], %52 {strides = array<i32>} : memref<1x1x10xf32, #tpu.memory_space<vmem>>, vector<1x1x10xf32>,
    return
  }
  func.func @transform_0(%arg0: i32) -> (i32, i32, i32) {
    %c0_i32 = arith.constant 0 : i32
    %c0_i32_0 = arith.constant 0 : i32
    %c0_i32_1 = arith.constant 0 : i32
    return %arg0, %c0_i32, %c0_i32_0 : i32, i32, i32
  }
  func.func @transform_1(%arg0: i32) -> (i32, i32) {
    %c0_i32 = arith.constant 0 : i32
    %c0_i32_0 = arith.constant 0 : i32
    %c0_i32_1 = arith.constant 0 : i32
    return %c0_i32, %c0_i32_0 : i32, i32
  }
  func.func @transform_2(%arg0: i32) -> (i32, i32) {
    %c0_i32 = arith.constant 0 : i32
    %c0_i32_0 = arith.constant 0 : i32
    %c0_i32_1 = arith.constant 0 : i32
    return %c0_i32, %c0_i32_0 : i32, i32
  }
  func.func @transform_3(%arg0: i32) -> (i32, i32, i32) {
    %c0_i32 = arith.constant 0 : i32
    %c0_i32_0 = arith.constant 0 : i32
    %c0_i32_1 = arith.constant 0 : i32
    %c0_i32_2 = arith.constant 0 : i32
    return %c0_i32, %c0_i32_0, %c0_i32_1 : i32, i32, i32
  }
  func.func @transform_4(%arg0: i32) -> (i32, i32) {
    %c0_i32 = arith.constant 0 : i32
    %c0_i32_0 = arith.constant 0 : i32
    %c0_i32_1 = arith.constant 0 : i32
    return %c0_i32, %c0_i32_0 : i32, i32
  }
  func.func @transform_5(%arg0: i32) -> (i32, i32, i32) {
    %c0_i32 = arith.constant 0 : i32
    %c0_i32_0 = arith.constant 0 : i32
    %c0_i32_1 = arith.constant 0 : i32
    return %arg0, %c0_i32, %c0_i32_0 : i32, i32, i32
  }
}

</mosaic_0001>

<llo_original>
// kernel: _fused_forward.1
$region0: #{_fused_forward.1}
  #allocation0 [shape = 'u32[]', space=smem, size = 0x4, offset = 0x4, fixed_abs, tag = 'smem constant byte address 0x4 - core index']
  #allocation1 [shape = 'u32[72,128]{1,0:T(1,128)}', space=vmem, size = 0x9000, scoped, tag = 'internal scratch']
  %s0 = inlined_call_operand.vmem [shape: f32[2,36,256], index: 0, kind: input, shape index: {}]
  %s1 = inlined_call_operand.vmem [shape: f32[8,36], index: 1, kind: input, shape index: {}]
  %s2 = inlined_call_operand.vmem [shape: f32[8,1], index: 2, kind: input, shape index: {}]
  %s3 = inlined_call_operand.vmem [shape: f32[8,256,10], index: 3, kind: input, shape index: {}]
  %s4 = inlined_call_operand.vmem [shape: f32[1,10], index: 4, kind: input, shape index: {}]
  %s5 = inlined_call_operand.hbm [shape: f32[2,1,10], index: 5, kind: output, shape index: {}]
  %s6 = sld [smem:[#allocation0]]
  $region53: #{_fused_forward.1} parent=0
    _
  %s8 = ssub.s32 1, %s6
  %s9 = scalar_select 0, %s8, %s6
  $region1: #{_fused_forward.1} parent=0
    #allocation2 [shape = 'u8[1024]{0}', space=vmem, size = 0x400, scoped, tag = 'output window, operand 0']
    #allocation3 [shape = 's32[2]{0}', space=sflag, size = 0x8, scoped, tag = 'scoped memory for _fused_forward.1']
    %10 = vsyncpa [#allocation3], 0
    %s11 = scalar_lea.sflag [#allocation3], 1
    %12 = vsyncpa %s11, 0
    loop: start=0, step=1, limit=4
    $region2: #{_fused_forward.1} parent=1 // loop_pre_header
      _
    $region3: #{_fused_forward.1} parent=1 // loop_header
      %s14 = sphi 0, %s18
      %p15 = scmp.ge.s32.totalorder %s14, 4
      %s24 = sphi 0, %s26
      %s27 = sphi 0, %s24
      %s28 = sphi 0, %s27
      %s44 = sphi 0, %s28
      %s48 = sphi 0, %s48
      %s50 = sphi 0, %s48
      %s51 = sphi 0, %s50
      %s65 = sphi 0, %s51
      %s69 = sphi 0, %s69
      %s71 = sphi 0, %s69
      %s72 = sphi 0, %s71
      %s86 = sphi 0, %s72
      %s90 = sphi 0, %s90
      %s92 = sphi 0, %s90
      %s93 = sphi 0, %s92
      %s107 = sphi 0, %s93
      %s111 = sphi 0, %s111
      %s113 = sphi 0, %s111
      %s114 = sphi 0, %s113
      %s128 = sphi 0, %s114
      %s134 = sphi 0, %s136
      %s137 = sphi 0, %s134
      %s138 = sphi 0, %s137
      %s154 = sphi 0, %s138
    $region4: #{_fused_forward.1} parent=1 // loop_header_branch
      %17 = sbr.rel (%p15) target = $region8
    $region5: #{_fused_forward.1} parent=1 // loop_body
      %s19 = ssub.s32 %s14, 1
      %s20 = ssub.s32 %s14, 2
      %s21 = sadd.s32 %s14, 1
      %s22 = ssub.s32 %s14, %s21
      %p23 = scmp.eq.s32.totalorder %s22, 0
      %s25 = sadd.s32 %s24, 1
      %s26 = scalar_select %p23, %s24, %s25
      %p29 = pneg %p23
      %p30 = scmp.eq.s32.totalorder %s14, 1
      %p31 = por %p29, %p30
      %p32 = scmp.ne.s32.totalorder %s24, %s27
      %p33 = scmp.eq.s32.totalorder %s14, 0
      %p34 = por %p32, %p33
      %p35 = scmp.ne.s32.totalorder %s24, %s27
      %p36 = scmp.eq.s32.totalorder %s19, 1
      %p37 = por %p35, %p36
      %p38 = scmp.ne.s32.totalorder %s27, %s28
      %p39 = scmp.eq.s32.totalorder %s19, 0
      %p40 = por %p38, %p39
      %p41 = scmp.ne.s32.totalorder %s27, %s28
      %p42 = scmp.eq.s32.totalorder %s20, 1
      %p43 = por %p41, %p42
      %p45 = scmp.ne.s32.totalorder %s28, %s44
      %p46 = scmp.eq.s32.totalorder %s20, 0
      %p47 = por %p45, %p46
      %s49 = sadd.s32 %s48, 1
      %p52 = scmp.eq.s32.totalorder %s14, 1
      %p53 = scmp.ne.s32.totalorder %s48, %s50
      %p54 = scmp.eq.s32.totalorder %s14, 0
      %p55 = por %p53, %p54
      %p56 = scmp.ne.s32.totalorder %s48, %s50
      %p57 = scmp.eq.s32.totalorder %s19, 1
      %p58 = por %p56, %p57
      %p59 = scmp.ne.s32.totalorder %s50, %s51
      %p60 = scmp.eq.s32.totalorder %s19, 0
      %p61 = por %p59, %p60
      %p62 = scmp.ne.s32.totalorder %s50, %s51
      %p63 = scmp.eq.s32.totalorder %s20, 1
      %p64 = por %p62, %p63
      %p66 = scmp.ne.s32.totalorder %s51, %s65
      %p67 = scmp.eq.s32.totalorder %s20, 0
      %p68 = por %p66, %p67
      %s70 = sadd.s32 %s69, 1
      %p73 = scmp.eq.s32.totalorder %s14, 1
      %p74 = scmp.ne.s32.totalorder %s69, %s71
      %p75 = scmp.eq.s32.totalorder %s14, 0
      %p76 = por %p74, %p75
      %p77 = scmp.ne.s32.totalorder %s69, %s71
      %p78 = scmp.eq.s32.totalorder %s19, 1
      %p79 = por %p77, %p78
      %p80 = scmp.ne.s32.totalorder %s71, %s72
      %p81 = scmp.eq.s32.totalorder %s19, 0
      %p82 = por %p80, %p81
      %p83 = scmp.ne.s32.totalorder %s71, %s72
      %p84 = scmp.eq.s32.totalorder %s20, 1
      %p85 = por %p83, %p84
      %p87 = scmp.ne.s32.totalorder %s72, %s86
      %p88 = scmp.eq.s32.totalorder %s20, 0
      %p89 = por %p87, %p88
      %s91 = sadd.s32 %s90, 1
      %p94 = scmp.eq.s32.totalorder %s14, 1
      %p95 = scmp.ne.s32.totalorder %s90, %s92
      %p96 = scmp.eq.s32.totalorder %s14, 0
      %p97 = por %p95, %p96
      %p98 = scmp.ne.s32.totalorder %s90, %s92
      %p99 = scmp.eq.s32.totalorder %s19, 1
      %p100 = por %p98, %p99
      %p101 = scmp.ne.s32.totalorder %s92, %s93
      %p102 = scmp.eq.s32.totalorder %s19, 0
      %p103 = por %p101, %p102
      %p104 = scmp.ne.s32.totalorder %s92, %s93
      %p105 = scmp.eq.s32.totalorder %s20, 1
      %p106 = por %p104, %p105
      %p108 = scmp.ne.s32.totalorder %s93, %s107
      %p109 = scmp.eq.s32.totalorder %s20, 0
      %p110 = por %p108, %p109
      %s112 = sadd.s32 %s111, 1
      %p115 = scmp.eq.s32.totalorder %s14, 1
      %p116 = scmp.ne.s32.totalorder %s111, %s113
      %p117 = scmp.eq.s32.totalorder %s14, 0
      %p118 = por %p116, %p117
      %p119 = scmp.ne.s32.totalorder %s111, %s113
      %p120 = scmp.eq.s32.totalorder %s19, 1
      %p121 = por %p119, %p120
      %p122 = scmp.ne.s32.totalorder %s113, %s114
      %p123 = scmp.eq.s32.totalorder %s19, 0
      %p124 = por %p122, %p123
      %p125 = scmp.ne.s32.totalorder %s113, %s114
      %p126 = scmp.eq.s32.totalorder %s20, 1
      %p127 = por %p125, %p126
      %p129 = scmp.ne.s32.totalorder %s114, %s128
      %p130 = scmp.eq.s32.totalorder %s20, 0
      %p131 = por %p129, %p130
      %s132 = ssub.s32 %s14, %s21
      %p133 = scmp.eq.s32.totalorder %s132, 0
      %s135 = sadd.s32 %s134, 1
      %s136 = scalar_select %p133, %s134, %s135
      %p139 = pneg %p133
      %p140 = scmp.eq.s32.totalorder %s14, 1
      %p141 = por %p139, %p140
      %p142 = scmp.ne.s32.totalorder %s134, %s137
      %p143 = scmp.eq.s32.totalorder %s14, 0
      %p144 = por %p142, %p143
      %p145 = scmp.ne.s32.totalorder %s134, %s137
      %p146 = scmp.eq.s32.totalorder %s19, 1
      %p147 = por %p145, %p146
      %p148 = scmp.ne.s32.totalorder %s137, %s138
      %p149 = scmp.eq.s32.totalorder %s19, 0
      %p150 = por %p148, %p149
      %p151 = scmp.ne.s32.totalorder %s137, %s138
      %p152 = scmp.eq.s32.totalorder %s20, 1
      %p153 = por %p151, %p152
      %p155 = scmp.ne.s32.totalorder %s138, %s154
      %p156 = scmp.eq.s32.totalorder %s20, 0
      %p157 = por %p155, %p156
      %p158 = scmp.le.s32.totalorder 1, %s14
      %p159 = scmp.lt.s32.totalorder %s14, 3
      %p160 = pnand %p158, %p159
      %p161 = pneg %p160
      // Predicated region
      $region9: #{_fused_forward.1} parent=5 // pred_check
        _
      $region10: #{_fused_forward.1} parent=5 // pred_check_branch
        %163 = sbr.rel (%p160) target = $region12
      $region11: #{_fused_forward.1} parent=5 // pred_region
        %s164 = ssub.s32 %s14, 1
        // Predicated region
        $region13: #{_fused_forward.1} parent=11 // pred_check
          %p165 = pneg %p61
        $region14: #{_fused_forward.1} parent=11 // pred_check_branch
          %167 = sbr.rel (%p165) target = $region16
        $region15: #{_fused_forward.1} parent=11 // pred_region
          _
        $region16: #{_fused_forward.1} parent=11 // pred_fallthru
          _
        // Predicated region
        $region17: #{_fused_forward.1} parent=11 // pred_check
          %p168 = pneg %p82
        $region18: #{_fused_forward.1} parent=11 // pred_check_branch
          %170 = sbr.rel (%p168) target = $region20
        $region19: #{_fused_forward.1} parent=11 // pred_region
          _
        $region20: #{_fused_forward.1} parent=11 // pred_fallthru
          _
        // Predicated region
        $region21: #{_fused_forward.1} parent=11 // pred_check
          %p171 = pneg %p103
        $region22: #{_fused_forward.1} parent=11 // pred_check_branch
          %173 = sbr.rel (%p171) target = $region24
        $region23: #{_fused_forward.1} parent=11 // pred_region
          _
        $region24: #{_fused_forward.1} parent=11 // pred_fallthru
          _
        // Predicated region
        $region25: #{_fused_forward.1} parent=11 // pred_check
          %p174 = pneg %p124
        $region26: #{_fused_forward.1} parent=11 // pred_check_branch
          %176 = sbr.rel (%p174) target = $region28
        $region27: #{_fused_forward.1} parent=11 // pred_region
          _
        $region28: #{_fused_forward.1} parent=11 // pred_fallthru
          _
      $region12: #{_fused_forward.1} parent=5 // pred_fallthru
        _
      %p177 = scmp.lt.s32.totalorder %s14, 2
      // Predicated region
      $region29: #{_fused_forward.1} parent=5 // pred_check
        %p178 = pneg %p177
      $region30: #{_fused_forward.1} parent=5 // pred_check_branch
        %180 = sbr.rel (%p178) target = $region32
      $region31: #{_fused_forward.1} parent=5 // pred_region
        // Predicated region
        $region33: #{_fused_forward.1} parent=31 // pred_check
          %p181 = pneg %p34
        $region34: #{_fused_forward.1} parent=31 // pred_check_branch
          %183 = sbr.rel (%p181) target = $region36
        $region35: #{_fused_forward.1} parent=31 // pred_region
          %p184 = scmp.lt.s32.totalorder %s14, 1
          %s185 = scalar_select %p184, %s14, 1
          %s186 = smul.addr %s185, 10
          %s187 = smul.addr %s186, 8
          %s188 = scalar_lea.vmem %s0, %s187
        $region36: #{_fused_forward.1} parent=31 // pred_fallthru
          _
      $region32: #{_fused_forward.1} parent=5 // pred_fallthru
        _
      %p189 = scmp.le.s32.totalorder 1, %s14
      %p190 = scmp.lt.s32.totalorder %s14, 3
      %p191 = pnand %p189, %p190
      %p192 = pneg %p191
      // Predicated region
      $region37: #{_fused_forward.1} parent=5 // pred_check
        _
      $region38: #{_fused_forward.1} parent=5 // pred_check_branch
        %194 = sbr.rel (%p191) target = $region40
      $region39: #{_fused_forward.1} parent=5 // pred_region
        %s195 = ssub.s32 %s14, 1
        %p196 = scmp.lt.s32.totalorder %s19, 1
        %s197 = scalar_select %p196, %s19, 1
        %s198 = smul.addr %s197, 10
        %s199 = smul.addr %s198, 8
        %s200 = scalar_lea.vmem %s0, %s199
        %p201 = pneg %p40
        %p202 = pneg %p37
        %p203 = pneg %p61
        %p204 = pneg %p58
        %p205 = pneg %p82
        %p206 = pneg %p79
        %p207 = pneg %p103
        %p208 = pneg %p100
        %p209 = pneg %p124
        %p210 = pneg %p121
        %p211 = pneg %p150
        %p212 = pneg %p147
        %s213 = sand.u32 %s137, 1
        %s214 = scalar_lea.sflag [#allocation3], %s213
        %s215 = sand.u32 %s137, 1
        %s216 = scalar_lea.vmem [#allocation2], %s215
        %p217 = scmp.lt.s32.totalorder %s19, 1
        %s218 = scalar_select %p217, %s19, 1
        %s219 = smul.addr %s218, 10
        %s220 = smul.addr %s219, 8
        %s221 = scalar_lea.vmem %s0, %s220
        %v222 = vld [vmem:[%s1] sm:$0xff]
        %v223 = vld [vmem:[%s221] sm:$0xff]
        %v224 = vld [vmem:[%s221 + $0x8] sm:$0xff]
        %v225 = vld [vmem:[%s221 + $0x10] sm:$0xff]
        %v226 = vld [vmem:[%s221 + $0x18] sm:$0xff]
        %v227 = vld [vmem:[%s221 + $0x20] sm:$0xff]
        %v228 = vld [vmem:[%s221 + $0x28] sm:$0xff]
        %v229 = vld [vmem:[%s221 + $0x30] sm:$0xff]
        %v230 = vld [vmem:[%s221 + $0x38] sm:$0xff]
        %v231 = vld [vmem:[%s221 + $0x40] sm:$0xf]
        %v232 = vld [vmem:[%s221 + $0x48] sm:$0xf]
        %v233 = vld [vmem:[%s2] sm:$0xff]
        %235 = vset.pattern.permute.xlu0 0
        %236 = vperm.xlu0 %235, %v233
        %v237 = vpop.permute.xlu0 %236
        %vm239 = vcmask 293888
        %v241 = vsel %vm239, %v222, 0
        %vm243 = vcmask 1043456
        %v245 = vsel %vm243, %v231, 0
        %v248 = vsel %vm243, %v232, 0
        %250 = vmatpush.msra.mxu0 0.0
        %251 = vmatpush.msra.mxu0 0.0
        %252 = vmatpush.msra.mxu0 0.0
        %253 = vmatpush.msra.mxu0 0.0
        %254 = vmatpush.msra.mxu0 0.0
        %255 = vmatpush.msra.mxu0 0.0
        %256 = vmatpush.msra.mxu0 0.0
        %257 = vmatpush.msra.mxu0 0.0
        %258 = vmatpush.msra.mxu0 0.0
        %259 = vmatpush.msra.mxu0 0.0
        %260 = vmatpush.msra.mxu0 0.0
        %261 = vmatpush.msra.mxu0 %v245
        %262 = vmatpush.msra.mxu0 %v229
        %263 = vmatpush.msra.mxu0 %v227
        %264 = vmatpush.msra.mxu0 %v225
        %265 = vmatpush.msra.mxu0 %v223
        %266 = vmatmul.f32.gmra.mxu0 %v241
        %v267 = vpop.f32.mrf.mxu0
        %v268 = vadd.f32 %v237, %v267
        %269 = vdwg.mxu0
        %270 = vmatpush.msra.mxu0 0.0
        %271 = vmatpush.msra.mxu0 0.0
        %272 = vmatpush.msra.mxu0 0.0
        %273 = vmatpush.msra.mxu0 0.0
        %274 = vmatpush.msra.mxu0 0.0
        %275 = vmatpush.msra.mxu0 0.0
        %276 = vmatpush.msra.mxu0 0.0
        %277 = vmatpush.msra.mxu0 0.0
        %278 = vmatpush.msra.mxu0 0.0
        %279 = vmatpush.msra.mxu0 0.0
        %280 = vmatpush.msra.mxu0 0.0
        %281 = vmatpush.msra.mxu0 %v248
        %282 = vmatpush.msra.mxu0 %v230
        %283 = vmatpush.msra.mxu0 %v228
        %284 = vmatpush.msra.mxu0 %v226
        %285 = vmatpush.msra.mxu0 %v224
        %286 = vmatmul.f32.gmra.mxu0 %v241
        %v287 = vpop.f32.mrf.mxu0
        %v288 = vadd.f32 %v237, %v287
        %289 = vdwg.mxu0
        %v290 = vmax.f32 %v268, 0.0
        %v291 = vmax.f32 %v288, 0.0
        %v292 = vld [vmem:[%s3] sm:$0xff]
        %v293 = vld [vmem:[%s3 + $0x8] sm:$0xff]
        %v294 = vld [vmem:[%s3 + $0x10] sm:$0xff]
        %v295 = vld [vmem:[%s3 + $0x18] sm:$0xff]
        %v296 = vld [vmem:[%s3 + $0x20] sm:$0xff]
        %v297 = vld [vmem:[%s3 + $0x28] sm:$0xff]
        %v298 = vld [vmem:[%s3 + $0x30] sm:$0xff]
        %v299 = vld [vmem:[%s3 + $0x38] sm:$0xff]
        %v300 = vld [vmem:[%s3 + $0x40] sm:$0xff]
        %v301 = vld [vmem:[%s3 + $0x48] sm:$0xff]
        %v302 = vld [vmem:[%s3 + $0x50] sm:$0xff]
        %v303 = vld [vmem:[%s3 + $0x58] sm:$0xff]
        %v304 = vld [vmem:[%s3 + $0x60] sm:$0xff]
        %v305 = vld [vmem:[%s3 + $0x68] sm:$0xff]
        %v306 = vld [vmem:[%s3 + $0x70] sm:$0xff]
        %v307 = vld [vmem:[%s3 + $0x78] sm:$0xff]
        %v308 = vld [vmem:[%s3 + $0x80] sm:$0xff]
        %v309 = vld [vmem:[%s3 + $0x88] sm:$0xff]
        %v310 = vld [vmem:[%s3 + $0x90] sm:$0xff]
        %v311 = vld [vmem:[%s3 + $0x98] sm:$0xff]
        %v312 = vld [vmem:[%s3 + $0xa0] sm:$0xff]
        %v313 = vld [vmem:[%s3 + $0xa8] sm:$0xff]
        %v314 = vld [vmem:[%s3 + $0xb0] sm:$0xff]
        %v315 = vld [vmem:[%s3 + $0xb8] sm:$0xff]
        %v316 = vld [vmem:[%s3 + $0xc0] sm:$0xff]
        %v317 = vld [vmem:[%s3 + $0xc8] sm:$0xff]
        %v318 = vld [vmem:[%s3 + $0xd0] sm:$0xff]
        %v319 = vld [vmem:[%s3 + $0xd8] sm:$0xff]
        %v320 = vld [vmem:[%s3 + $0xe0] sm:$0xff]
        %v321 = vld [vmem:[%s3 + $0xe8] sm:$0xff]
        %v322 = vld [vmem:[%s3 + $0xf0] sm:$0xff]
        %v323 = vld [vmem:[%s3 + $0xf8] sm:$0xff]
        %s324 = scalar_lea.vmem %s3, 256
        %v325 = vld [vmem:[%s324] sm:$0xff]
        %v326 = vld [vmem:[%s324 + $0x8] sm:$0xff]
        %v327 = vld [vmem:[%s324 + $0x10] sm:$0xff]
        %v328 = vld [vmem:[%s324 + $0x18] sm:$0xff]
        %v329 = vld [vmem:[%s324 + $0x20] sm:$0xff]
        %v330 = vld [vmem:[%s324 + $0x28] sm:$0xff]
        %v331 = vld [vmem:[%s324 + $0x30] sm:$0xff]
        %v332 = vld [vmem:[%s324 + $0x38] sm:$0xff]
        %v333 = vld [vmem:[%s324 + $0x40] sm:$0xff]
        %v334 = vld [vmem:[%s324 + $0x48] sm:$0xff]
        %v335 = vld [vmem:[%s324 + $0x50] sm:$0xff]
        %v336 = vld [vmem:[%s324 + $0x58] sm:$0xff]
        %v337 = vld [vmem:[%s324 + $0x60] sm:$0xff]
        %v338 = vld [vmem:[%s324 + $0x68] sm:$0xff]
        %v339 = vld [vmem:[%s324 + $0x70] sm:$0xff]
        %v340 = vld [vmem:[%s324 + $0x78] sm:$0xff]
        %v341 = vld [vmem:[%s324 + $0x80] sm:$0xff]
        %v342 = vld [vmem:[%s324 + $0x88] sm:$0xff]
        %v343 = vld [vmem:[%s324 + $0x90] sm:$0xff]
        %v344 = vld [vmem:[%s324 + $0x98] sm:$0xff]
        %v345 = vld [vmem:[%s324 + $0xa0] sm:$0xff]
        %v346 = vld [vmem:[%s324 + $0xa8] sm:$0xff]
        %v347 = vld [vmem:[%s324 + $0xb0] sm:$0xff]
        %v348 = vld [vmem:[%s324 + $0xb8] sm:$0xff]
        %v349 = vld [vmem:[%s324 + $0xc0] sm:$0xff]
        %v350 = vld [vmem:[%s324 + $0xc8] sm:$0xff]
        %v351 = vld [vmem:[%s324 + $0xd0] sm:$0xff]
        %v352 = vld [vmem:[%s324 + $0xd8] sm:$0xff]
        %v353 = vld [vmem:[%s324 + $0xe0] sm:$0xff]
        %v354 = vld [vmem:[%s324 + $0xe8] sm:$0xff]
        %v355 = vld [vmem:[%s324 + $0xf0] sm:$0xff]
        %v356 = vld [vmem:[%s324 + $0xf8] sm:$0xff]
        %v359 = vrot.slane %v290, 1
        %v360 = vrot.slane %v291, 1
        %363 = vmatpush.msra.mxu0 %v340
        %364 = vmatpush.msra.mxu0 %v339
        %365 = vmatpush.msra.mxu0 %v338
        %366 = vmatpush.msra.mxu0 %v337
        %367 = vmatpush.msra.mxu0 %v336
        %368 = vmatpush.msra.mxu0 %v335
        %369 = vmatpush.msra.mxu0 %v334
        %370 = vmatpush.msra.mxu0 %v333
        %371 = vmatpush.msra.mxu0 %v332
        %372 = vmatpush.msra.mxu0 %v331
        %373 = vmatpush.msra.mxu0 %v330
        %374 = vmatpush.msra.mxu0 %v329
        %375 = vmatpush.msra.mxu0 %v328
        %376 = vmatpush.msra.mxu0 %v327
        %377 = vmatpush.msra.mxu0 %v326
        %378 = vmatpush.msra.mxu0 %v325
        %379 = vmatmul.f32.gmra.mxu0 %v359
        %v380 = vpop.f32.mrf.mxu0
        %v381 = vadd.f32 0.0, %v380
        %382 = vdwg.mxu0
        %383 = vmatpush.msra.mxu0 %v356
        %384 = vmatpush.msra.mxu0 %v355
        %385 = vmatpush.msra.mxu0 %v354
        %386 = vmatpush.msra.mxu0 %v353
        %387 = vmatpush.msra.mxu0 %v352
        %388 = vmatpush.msra.mxu0 %v351
        %389 = vmatpush.msra.mxu0 %v350
        %390 = vmatpush.msra.mxu0 %v349
        %391 = vmatpush.msra.mxu0 %v348
        %392 = vmatpush.msra.mxu0 %v347
        %393 = vmatpush.msra.mxu0 %v346
        %394 = vmatpush.msra.mxu0 %v345
        %395 = vmatpush.msra.mxu0 %v344
        %396 = vmatpush.msra.mxu0 %v343
        %397 = vmatpush.msra.mxu0 %v342
        %398 = vmatpush.msra.mxu0 %v341
        %399 = vmatmul.f32.gmra.mxu0 %v360
        %v400 = vpop.f32.mrf.mxu0
        %v401 = vadd.f32 %v381, %v400
        %402 = vdwg.mxu0
        %403 = vmatpush.msra.mxu0 %v307
        %404 = vmatpush.msra.mxu0 %v306
        %405 = vmatpush.msra.mxu0 %v305
        %406 = vmatpush.msra.mxu0 %v304
        %407 = vmatpush.msra.mxu0 %v303
        %408 = vmatpush.msra.mxu0 %v302
        %409 = vmatpush.msra.mxu0 %v301
        %410 = vmatpush.msra.mxu0 %v300
        %411 = vmatpush.msra.mxu0 %v299
        %412 = vmatpush.msra.mxu0 %v298
        %413 = vmatpush.msra.mxu0 %v297
        %414 = vmatpush.msra.mxu0 %v296
        %415 = vmatpush.msra.mxu0 %v295
        %416 = vmatpush.msra.mxu0 %v294
        %417 = vmatpush.msra.mxu0 %v293
        %418 = vmatpush.msra.mxu0 %v292
        %419 = vmatmul.f32.gmra.mxu0 %v290
        %v420 = vpop.f32.mrf.mxu0
        %v421 = vadd.f32 %v401, %v420
        %422 = vdwg.mxu0
        %423 = vmatpush.msra.mxu0 %v323
        %424 = vmatpush.msra.mxu0 %v322
        %425 = vmatpush.msra.mxu0 %v321
        %426 = vmatpush.msra.mxu0 %v320
        %427 = vmatpush.msra.mxu0 %v319
        %428 = vmatpush.msra.mxu0 %v318
        %429 = vmatpush.msra.mxu0 %v317
        %430 = vmatpush.msra.mxu0 %v316
        %431 = vmatpush.msra.mxu0 %v315
        %432 = vmatpush.msra.mxu0 %v314
        %433 = vmatpush.msra.mxu0 %v313
        %434 = vmatpush.msra.mxu0 %v312
        %435 = vmatpush.msra.mxu0 %v311
        %436 = vmatpush.msra.mxu0 %v310
        %437 = vmatpush.msra.mxu0 %v309
        %438 = vmatpush.msra.mxu0 %v308
        %439 = vmatmul.f32.gmra.mxu0 %v291
        %v440 = vpop.f32.mrf.mxu0
        %v441 = vadd.f32 %v421, %v440
        %442 = vdwg.mxu0
        %s443 = scalar_lea.vmem %s3, 512
        %v444 = vld [vmem:[%s443] sm:$0xff]
        %v445 = vld [vmem:[%s443 + $0x8] sm:$0xff]
        %v446 = vld [vmem:[%s443 + $0x10] sm:$0xff]
        %v447 = vld [vmem:[%s443 + $0x18] sm:$0xff]
        %v448 = vld [vmem:[%s443 + $0x20] sm:$0xff]
        %v449 = vld [vmem:[%s443 + $0x28] sm:$0xff]
        %v450 = vld [vmem:[%s443 + $0x30] sm:$0xff]
        %v451 = vld [vmem:[%s443 + $0x38] sm:$0xff]
        %v452 = vld [vmem:[%s443 + $0x40] sm:$0xff]
        %v453 = vld [vmem:[%s443 + $0x48] sm:$0xff]
        %v454 = vld [vmem:[%s443 + $0x50] sm:$0xff]
        %v455 = vld [vmem:[%s443 + $0x58] sm:$0xff]
        %v456 = vld [vmem:[%s443 + $0x60] sm:$0xff]
        %v457 = vld [vmem:[%s443 + $0x68] sm:$0xff]
        %v458 = vld [vmem:[%s443 + $0x70] sm:$0xff]
        %v459 = vld [vmem:[%s443 + $0x78] sm:$0xff]
        %v460 = vld [vmem:[%s443 + $0x80] sm:$0xff]
        %v461 = vld [vmem:[%s443 + $0x88] sm:$0xff]
        %v462 = vld [vmem:[%s443 + $0x90] sm:$0xff]
        %v463 = vld [vmem:[%s443 + $0x98] sm:$0xff]
        %v464 = vld [vmem:[%s443 + $0xa0] sm:$0xff]
        %v465 = vld [vmem:[%s443 + $0xa8] sm:$0xff]
        %v466 = vld [vmem:[%s443 + $0xb0] sm:$0xff]
        %v467 = vld [vmem:[%s443 + $0xb8] sm:$0xff]
        %v468 = vld [vmem:[%s443 + $0xc0] sm:$0xff]
        %v469 = vld [vmem:[%s443 + $0xc8] sm:$0xff]
        %v470 = vld [vmem:[%s443 + $0xd0] sm:$0xff]
        %v471 = vld [vmem:[%s443 + $0xd8] sm:$0xff]
        %v472 = vld [vmem:[%s443 + $0xe0] sm:$0xff]
        %v473 = vld [vmem:[%s443 + $0xe8] sm:$0xff]
        %v474 = vld [vmem:[%s443 + $0xf0] sm:$0xff]
        %v475 = vld [vmem:[%s443 + $0xf8] sm:$0xff]
        %v476 = vrot.slane %v290, 2
        %v477 = vrot.slane %v291, 2
        %480 = vmatpush.msra.mxu0 %v459
        %481 = vmatpush.msra.mxu0 %v458
        %482 = vmatpush.msra.mxu0 %v457
        %483 = vmatpush.msra.mxu0 %v456
        %484 = vmatpush.msra.mxu0 %v455
        %485 = vmatpush.msra.mxu0 %v454
        %486 = vmatpush.msra.mxu0 %v453
        %487 = vmatpush.msra.mxu0 %v452
        %488 = vmatpush.msra.mxu0 %v451
        %489 = vmatpush.msra.mxu0 %v450
        %490 = vmatpush.msra.mxu0 %v449
        %491 = vmatpush.msra.mxu0 %v448
        %492 = vmatpush.msra.mxu0 %v447
        %493 = vmatpush.msra.mxu0 %v446
        %494 = vmatpush.msra.mxu0 %v445
        %495 = vmatpush.msra.mxu0 %v444
        %496 = vmatmul.f32.gmra.mxu0 %v476
        %v497 = vpop.f32.mrf.mxu0
        %v498 = vadd.f32 0.0, %v497
        %499 = vdwg.mxu0
        %500 = vmatpush.msra.mxu0 %v475
        %501 = vmatpush.msra.mxu0 %v474
        %502 = vmatpush.msra.mxu0 %v473
        %503 = vmatpush.msra.mxu0 %v472
        %504 = vmatpush.msra.mxu0 %v471
        %505 = vmatpush.msra.mxu0 %v470
        %506 = vmatpush.msra.mxu0 %v469
        %507 = vmatpush.msra.mxu0 %v468
        %508 = vmatpush.msra.mxu0 %v467
        %509 = vmatpush.msra.mxu0 %v466
        %510 = vmatpush.msra.mxu0 %v465
        %511 = vmatpush.msra.mxu0 %v464
        %512 = vmatpush.msra.mxu0 %v463
        %513 = vmatpush.msra.mxu0 %v462
        %514 = vmatpush.msra.mxu0 %v461
        %515 = vmatpush.msra.mxu0 %v460
        %516 = vmatmul.f32.gmra.mxu0 %v477
        %v517 = vpop.f32.mrf.mxu0
        %v518 = vadd.f32 %v498, %v517
        %519 = vdwg.mxu0
        %v520 = vadd.f32 %v441, %v518
        %s521 = scalar_lea.vmem %s3, 768
        %v522 = vld [vmem:[%s521] sm:$0xff]
        %v523 = vld [vmem:[%s521 + $0x8] sm:$0xff]
        %v524 = vld [vmem:[%s521 + $0x10] sm:$0xff]
        %v525 = vld [vmem:[%s521 + $0x18] sm:$0xff]
        %v526 = vld [vmem:[%s521 + $0x20] sm:$0xff]
        %v527 = vld [vmem:[%s521 + $0x28] sm:$0xff]
        %v528 = vld [vmem:[%s521 + $0x30] sm:$0xff]
        %v529 = vld [vmem:[%s521 + $0x38] sm:$0xff]
        %v530 = vld [vmem:[%s521 + $0x40] sm:$0xff]
        %v531 = vld [vmem:[%s521 + $0x48] sm:$0xff]
        %v532 = vld [vmem:[%s521 + $0x50] sm:$0xff]
        %v533 = vld [vmem:[%s521 + $0x58] sm:$0xff]
        %v534 = vld [vmem:[%s521 + $0x60] sm:$0xff]
        %v535 = vld [vmem:[%s521 + $0x68] sm:$0xff]
        %v536 = vld [vmem:[%s521 + $0x70] sm:$0xff]
        %v537 = vld [vmem:[%s521 + $0x78] sm:$0xff]
        %v538 = vld [vmem:[%s521 + $0x80] sm:$0xff]
        %v539 = vld [vmem:[%s521 + $0x88] sm:$0xff]
        %v540 = vld [vmem:[%s521 + $0x90] sm:$0xff]
        %v541 = vld [vmem:[%s521 + $0x98] sm:$0xff]
        %v542 = vld [vmem:[%s521 + $0xa0] sm:$0xff]
        %v543 = vld [vmem:[%s521 + $0xa8] sm:$0xff]
        %v544 = vld [vmem:[%s521 + $0xb0] sm:$0xff]
        %v545 = vld [vmem:[%s521 + $0xb8] sm:$0xff]
        %v546 = vld [vmem:[%s521 + $0xc0] sm:$0xff]
        %v547 = vld [vmem:[%s521 + $0xc8] sm:$0xff]
        %v548 = vld [vmem:[%s521 + $0xd0] sm:$0xff]
        %v549 = vld [vmem:[%s521 + $0xd8] sm:$0xff]
        %v550 = vld [vmem:[%s521 + $0xe0] sm:$0xff]
        %v551 = vld [vmem:[%s521 + $0xe8] sm:$0xff]
        %v552 = vld [vmem:[%s521 + $0xf0] sm:$0xff]
        %v553 = vld [vmem:[%s521 + $0xf8] sm:$0xff]
        %v554 = vrot.slane %v290, 3
        %v555 = vrot.slane %v291, 3
        %558 = vmatpush.msra.mxu0 %v537
        %559 = vmatpush.msra.mxu0 %v536
        %560 = vmatpush.msra.mxu0 %v535
        %561 = vmatpush.msra.mxu0 %v534
        %562 = vmatpush.msra.mxu0 %v533
        %563 = vmatpush.msra.mxu0 %v532
        %564 = vmatpush.msra.mxu0 %v531
        %565 = vmatpush.msra.mxu0 %v530
        %566 = vmatpush.msra.mxu0 %v529
        %567 = vmatpush.msra.mxu0 %v528
        %568 = vmatpush.msra.mxu0 %v527
        %569 = vmatpush.msra.mxu0 %v526
        %570 = vmatpush.msra.mxu0 %v525
        %571 = vmatpush.msra.mxu0 %v524
        %572 = vmatpush.msra.mxu0 %v523
        %573 = vmatpush.msra.mxu0 %v522
        %574 = vmatmul.f32.gmra.mxu0 %v554
        %v575 = vpop.f32.mrf.mxu0
        %v576 = vadd.f32 0.0, %v575
        %577 = vdwg.mxu0
        %578 = vmatpush.msra.mxu0 %v553
        %579 = vmatpush.msra.mxu0 %v552
        %580 = vmatpush.msra.mxu0 %v551
        %581 = vmatpush.msra.mxu0 %v550
        %582 = vmatpush.msra.mxu0 %v549
        %583 = vmatpush.msra.mxu0 %v548
        %584 = vmatpush.msra.mxu0 %v547
        %585 = vmatpush.msra.mxu0 %v546
        %586 = vmatpush.msra.mxu0 %v545
        %587 = vmatpush.msra.mxu0 %v544
        %588 = vmatpush.msra.mxu0 %v543
        %589 = vmatpush.msra.mxu0 %v542
        %590 = vmatpush.msra.mxu0 %v541
        %591 = vmatpush.msra.mxu0 %v540
        %592 = vmatpush.msra.mxu0 %v539
        %593 = vmatpush.msra.mxu0 %v538
        %594 = vmatmul.f32.gmra.mxu0 %v555
        %v595 = vpop.f32.mrf.mxu0
        %v596 = vadd.f32 %v576, %v595
        %597 = vdwg.mxu0
        %v598 = vadd.f32 %v520, %v596
        %s599 = scalar_lea.vmem %s3, 1024
        %v600 = vld [vmem:[%s599] sm:$0xff]
        %v601 = vld [vmem:[%s599 + $0x8] sm:$0xff]
        %v602 = vld [vmem:[%s599 + $0x10] sm:$0xff]
        %v603 = vld [vmem:[%s599 + $0x18] sm:$0xff]
        %v604 = vld [vmem:[%s599 + $0x20] sm:$0xff]
        %v605 = vld [vmem:[%s599 + $0x28] sm:$0xff]
        %v606 = vld [vmem:[%s599 + $0x30] sm:$0xff]
        %v607 = vld [vmem:[%s599 + $0x38] sm:$0xff]
        %v608 = vld [vmem:[%s599 + $0x40] sm:$0xff]
        %v609 = vld [vmem:[%s599 + $0x48] sm:$0xff]
        %v610 = vld [vmem:[%s599 + $0x50] sm:$0xff]
        %v611 = vld [vmem:[%s599 + $0x58] sm:$0xff]
        %v612 = vld [vmem:[%s599 + $0x60] sm:$0xff]
        %v613 = vld [vmem:[%s599 + $0x68] sm:$0xff]
        %v614 = vld [vmem:[%s599 + $0x70] sm:$0xff]
        %v615 = vld [vmem:[%s599 + $0x78] sm:$0xff]
        %v616 = vld [vmem:[%s599 + $0x80] sm:$0xff]
        %v617 = vld [vmem:[%s599 + $0x88] sm:$0xff]
        %v618 = vld [vmem:[%s599 + $0x90] sm:$0xff]
        %v619 = vld [vmem:[%s599 + $0x98] sm:$0xff]
        %v620 = vld [vmem:[%s599 + $0xa0] sm:$0xff]
        %v621 = vld [vmem:[%s599 + $0xa8] sm:$0xff]
        %v622 = vld [vmem:[%s599 + $0xb0] sm:$0xff]
        %v623 = vld [vmem:[%s599 + $0xb8] sm:$0xff]
        %v624 = vld [vmem:[%s599 + $0xc0] sm:$0xff]
        %v625 = vld [vmem:[%s599 + $0xc8] sm:$0xff]
        %v626 = vld [vmem:[%s599 + $0xd0] sm:$0xff]
        %v627 = vld [vmem:[%s599 + $0xd8] sm:$0xff]
        %v628 = vld [vmem:[%s599 + $0xe0] sm:$0xff]
        %v629 = vld [vmem:[%s599 + $0xe8] sm:$0xff]
        %v630 = vld [vmem:[%s599 + $0xf0] sm:$0xff]
        %v631 = vld [vmem:[%s599 + $0xf8] sm:$0xff]
        %v632 = vrot.slane %v290, 4
        %v633 = vrot.slane %v291, 4
        %636 = vmatpush.msra.mxu0 %v615
        %637 = vmatpush.msra.mxu0 %v614
        %638 = vmatpush.msra.mxu0 %v613
        %639 = vmatpush.msra.mxu0 %v612
        %640 = vmatpush.msra.mxu0 %v611
        %641 = vmatpush.msra.mxu0 %v610
        %642 = vmatpush.msra.mxu0 %v609
        %643 = vmatpush.msra.mxu0 %v608
        %644 = vmatpush.msra.mxu0 %v607
        %645 = vmatpush.msra.mxu0 %v606
        %646 = vmatpush.msra.mxu0 %v605
        %647 = vmatpush.msra.mxu0 %v604
        %648 = vmatpush.msra.mxu0 %v603
        %649 = vmatpush.msra.mxu0 %v602
        %650 = vmatpush.msra.mxu0 %v601
        %651 = vmatpush.msra.mxu0 %v600
        %652 = vmatmul.f32.gmra.mxu0 %v632
        %v653 = vpop.f32.mrf.mxu0
        %v654 = vadd.f32 0.0, %v653
        %655 = vdwg.mxu0
        %656 = vmatpush.msra.mxu0 %v631
        %657 = vmatpush.msra.mxu0 %v630
        %658 = vmatpush.msra.mxu0 %v629
        %659 = vmatpush.msra.mxu0 %v628
        %660 = vmatpush.msra.mxu0 %v627
        %661 = vmatpush.msra.mxu0 %v626
        %662 = vmatpush.msra.mxu0 %v625
        %663 = vmatpush.msra.mxu0 %v624
        %664 = vmatpush.msra.mxu0 %v623
        %665 = vmatpush.msra.mxu0 %v622
        %666 = vmatpush.msra.mxu0 %v621
        %667 = vmatpush.msra.mxu0 %v620
        %668 = vmatpush.msra.mxu0 %v619
        %669 = vmatpush.msra.mxu0 %v618
        %670 = vmatpush.msra.mxu0 %v617
        %671 = vmatpush.msra.mxu0 %v616
        %672 = vmatmul.f32.gmra.mxu0 %v633
        %v673 = vpop.f32.mrf.mxu0
        %v674 = vadd.f32 %v654, %v673
        %675 = vdwg.mxu0
        %v676 = vadd.f32 %v598, %v674
        %s677 = scalar_lea.vmem %s3, 1280
        %v678 = vld [vmem:[%s677] sm:$0xff]
        %v679 = vld [vmem:[%s677 + $0x8] sm:$0xff]
        %v680 = vld [vmem:[%s677 + $0x10] sm:$0xff]
        %v681 = vld [vmem:[%s677 + $0x18] sm:$0xff]
        %v682 = vld [vmem:[%s677 + $0x20] sm:$0xff]
        %v683 = vld [vmem:[%s677 + $0x28] sm:$0xff]
        %v684 = vld [vmem:[%s677 + $0x30] sm:$0xff]
        %v685 = vld [vmem:[%s677 + $0x38] sm:$0xff]
        %v686 = vld [vmem:[%s677 + $0x40] sm:$0xff]
        %v687 = vld [vmem:[%s677 + $0x48] sm:$0xff]
        %v688 = vld [vmem:[%s677 + $0x50] sm:$0xff]
        %v689 = vld [vmem:[%s677 + $0x58] sm:$0xff]
        %v690 = vld [vmem:[%s677 + $0x60] sm:$0xff]
        %v691 = vld [vmem:[%s677 + $0x68] sm:$0xff]
        %v692 = vld [vmem:[%s677 + $0x70] sm:$0xff]
        %v693 = vld [vmem:[%s677 + $0x78] sm:$0xff]
        %v694 = vld [vmem:[%s677 + $0x80] sm:$0xff]
        %v695 = vld [vmem:[%s677 + $0x88] sm:$0xff]
        %v696 = vld [vmem:[%s677 + $0x90] sm:$0xff]
        %v697 = vld [vmem:[%s677 + $0x98] sm:$0xff]
        %v698 = vld [vmem:[%s677 + $0xa0] sm:$0xff]
        %v699 = vld [vmem:[%s677 + $0xa8] sm:$0xff]
        %v700 = vld [vmem:[%s677 + $0xb0] sm:$0xff]
        %v701 = vld [vmem:[%s677 + $0xb8] sm:$0xff]
        %v702 = vld [vmem:[%s677 + $0xc0] sm:$0xff]
        %v703 = vld [vmem:[%s677 + $0xc8] sm:$0xff]
        %v704 = vld [vmem:[%s677 + $0xd0] sm:$0xff]
        %v705 = vld [vmem:[%s677 + $0xd8] sm:$0xff]
        %v706 = vld [vmem:[%s677 + $0xe0] sm:$0xff]
        %v707 = vld [vmem:[%s677 + $0xe8] sm:$0xff]
        %v708 = vld [vmem:[%s677 + $0xf0] sm:$0xff]
        %v709 = vld [vmem:[%s677 + $0xf8] sm:$0xff]
        %v710 = vrot.slane %v290, 5
        %v711 = vrot.slane %v291, 5
        %714 = vmatpush.msra.mxu0 %v693
        %715 = vmatpush.msra.mxu0 %v692
        %716 = vmatpush.msra.mxu0 %v691
        %717 = vmatpush.msra.mxu0 %v690
        %718 = vmatpush.msra.mxu0 %v689
        %719 = vmatpush.msra.mxu0 %v688
        %720 = vmatpush.msra.mxu0 %v687
        %721 = vmatpush.msra.mxu0 %v686
        %722 = vmatpush.msra.mxu0 %v685
        %723 = vmatpush.msra.mxu0 %v684
        %724 = vmatpush.msra.mxu0 %v683
        %725 = vmatpush.msra.mxu0 %v682
        %726 = vmatpush.msra.mxu0 %v681
        %727 = vmatpush.msra.mxu0 %v680
        %728 = vmatpush.msra.mxu0 %v679
        %729 = vmatpush.msra.mxu0 %v678
        %730 = vmatmul.f32.gmra.mxu0 %v710
        %v731 = vpop.f32.mrf.mxu0
        %v732 = vadd.f32 0.0, %v731
        %733 = vdwg.mxu0
        %734 = vmatpush.msra.mxu0 %v709
        %735 = vmatpush.msra.mxu0 %v708
        %736 = vmatpush.msra.mxu0 %v707
        %737 = vmatpush.msra.mxu0 %v706
        %738 = vmatpush.msra.mxu0 %v705
        %739 = vmatpush.msra.mxu0 %v704
        %740 = vmatpush.msra.mxu0 %v703
        %741 = vmatpush.msra.mxu0 %v702
        %742 = vmatpush.msra.mxu0 %v701
        %743 = vmatpush.msra.mxu0 %v700
        %744 = vmatpush.msra.mxu0 %v699
        %745 = vmatpush.msra.mxu0 %v698
        %746 = vmatpush.msra.mxu0 %v697
        %747 = vmatpush.msra.mxu0 %v696
        %748 = vmatpush.msra.mxu0 %v695
        %749 = vmatpush.msra.mxu0 %v694
        %750 = vmatmul.f32.gmra.mxu0 %v711
        %v751 = vpop.f32.mrf.mxu0
        %v752 = vadd.f32 %v732, %v751
        %753 = vdwg.mxu0
        %v754 = vadd.f32 %v676, %v752
        %s755 = scalar_lea.vmem %s3, 1536
        %v756 = vld [vmem:[%s755] sm:$0xff]
        %v757 = vld [vmem:[%s755 + $0x8] sm:$0xff]
        %v758 = vld [vmem:[%s755 + $0x10] sm:$0xff]
        %v759 = vld [vmem:[%s755 + $0x18] sm:$0xff]
        %v760 = vld [vmem:[%s755 + $0x20] sm:$0xff]
        %v761 = vld [vmem:[%s755 + $0x28] sm:$0xff]
        %v762 = vld [vmem:[%s755 + $0x30] sm:$0xff]
        %v763 = vld [vmem:[%s755 + $0x38] sm:$0xff]
        %v764 = vld [vmem:[%s755 + $0x40] sm:$0xff]
        %v765 = vld [vmem:[%s755 + $0x48] sm:$0xff]
        %v766 = vld [vmem:[%s755 + $0x50] sm:$0xff]
        %v767 = vld [vmem:[%s755 + $0x58] sm:$0xff]
        %v768 = vld [vmem:[%s755 + $0x60] sm:$0xff]
        %v769 = vld [vmem:[%s755 + $0x68] sm:$0xff]
        %v770 = vld [vmem:[%s755 + $0x70] sm:$0xff]
        %v771 = vld [vmem:[%s755 + $0x78] sm:$0xff]
        %v772 = vld [vmem:[%s755 + $0x80] sm:$0xff]
        %v773 = vld [vmem:[%s755 + $0x88] sm:$0xff]
        %v774 = vld [vmem:[%s755 + $0x90] sm:$0xff]
        %v775 = vld [vmem:[%s755 + $0x98] sm:$0xff]
        %v776 = vld [vmem:[%s755 + $0xa0] sm:$0xff]
        %v777 = vld [vmem:[%s755 + $0xa8] sm:$0xff]
        %v778 = vld [vmem:[%s755 + $0xb0] sm:$0xff]
        %v779 = vld [vmem:[%s755 + $0xb8] sm:$0xff]
        %v780 = vld [vmem:[%s755 + $0xc0] sm:$0xff]
        %v781 = vld [vmem:[%s755 + $0xc8] sm:$0xff]
        %v782 = vld [vmem:[%s755 + $0xd0] sm:$0xff]
        %v783 = vld [vmem:[%s755 + $0xd8] sm:$0xff]
        %v784 = vld [vmem:[%s755 + $0xe0] sm:$0xff]
        %v785 = vld [vmem:[%s755 + $0xe8] sm:$0xff]
        %v786 = vld [vmem:[%s755 + $0xf0] sm:$0xff]
        %v787 = vld [vmem:[%s755 + $0xf8] sm:$0xff]
        %v788 = vrot.slane %v290, 6
        %v789 = vrot.slane %v291, 6
        %792 = vmatpush.msra.mxu0 %v771
        %793 = vmatpush.msra.mxu0 %v770
        %794 = vmatpush.msra.mxu0 %v769
        %795 = vmatpush.msra.mxu0 %v768
        %796 = vmatpush.msra.mxu0 %v767
        %797 = vmatpush.msra.mxu0 %v766
        %798 = vmatpush.msra.mxu0 %v765
        %799 = vmatpush.msra.mxu0 %v764
        %800 = vmatpush.msra.mxu0 %v763
        %801 = vmatpush.msra.mxu0 %v762
        %802 = vmatpush.msra.mxu0 %v761
        %803 = vmatpush.msra.mxu0 %v760
        %804 = vmatpush.msra.mxu0 %v759
        %805 = vmatpush.msra.mxu0 %v758
        %806 = vmatpush.msra.mxu0 %v757
        %807 = vmatpush.msra.mxu0 %v756
        %808 = vmatmul.f32.gmra.mxu0 %v788
        %v809 = vpop.f32.mrf.mxu0
        %v810 = vadd.f32 0.0, %v809
        %811 = vdwg.mxu0
        %812 = vmatpush.msra.mxu0 %v787
        %813 = vmatpush.msra.mxu0 %v786
        %814 = vmatpush.msra.mxu0 %v785
        %815 = vmatpush.msra.mxu0 %v784
        %816 = vmatpush.msra.mxu0 %v783
        %817 = vmatpush.msra.mxu0 %v782
        %818 = vmatpush.msra.mxu0 %v781
        %819 = vmatpush.msra.mxu0 %v780
        %820 = vmatpush.msra.mxu0 %v779
        %821 = vmatpush.msra.mxu0 %v778
        %822 = vmatpush.msra.mxu0 %v777
        %823 = vmatpush.msra.mxu0 %v776
        %824 = vmatpush.msra.mxu0 %v775
        %825 = vmatpush.msra.mxu0 %v774
        %826 = vmatpush.msra.mxu0 %v773
        %827 = vmatpush.msra.mxu0 %v772
        %828 = vmatmul.f32.gmra.mxu0 %v789
        %v829 = vpop.f32.mrf.mxu0
        %v830 = vadd.f32 %v810, %v829
        %831 = vdwg.mxu0
        %v832 = vadd.f32 %v754, %v830
        %s833 = scalar_lea.vmem %s3, 1792
        %v834 = vld [vmem:[%s833] sm:$0xff]
        %v835 = vld [vmem:[%s833 + $0x8] sm:$0xff]
        %v836 = vld [vmem:[%s833 + $0x10] sm:$0xff]
        %v837 = vld [vmem:[%s833 + $0x18] sm:$0xff]
        %v838 = vld [vmem:[%s833 + $0x20] sm:$0xff]
        %v839 = vld [vmem:[%s833 + $0x28] sm:$0xff]
        %v840 = vld [vmem:[%s833 + $0x30] sm:$0xff]
        %v841 = vld [vmem:[%s833 + $0x38] sm:$0xff]
        %v842 = vld [vmem:[%s833 + $0x40] sm:$0xff]
        %v843 = vld [vmem:[%s833 + $0x48] sm:$0xff]
        %v844 = vld [vmem:[%s833 + $0x50] sm:$0xff]
        %v845 = vld [vmem:[%s833 + $0x58] sm:$0xff]
        %v846 = vld [vmem:[%s833 + $0x60] sm:$0xff]
        %v847 = vld [vmem:[%s833 + $0x68] sm:$0xff]
        %v848 = vld [vmem:[%s833 + $0x70] sm:$0xff]
        %v849 = vld [vmem:[%s833 + $0x78] sm:$0xff]
        %v850 = vld [vmem:[%s833 + $0x80] sm:$0xff]
        %v851 = vld [vmem:[%s833 + $0x88] sm:$0xff]
        %v852 = vld [vmem:[%s833 + $0x90] sm:$0xff]
        %v853 = vld [vmem:[%s833 + $0x98] sm:$0xff]
        %v854 = vld [vmem:[%s833 + $0xa0] sm:$0xff]
        %v855 = vld [vmem:[%s833 + $0xa8] sm:$0xff]
        %v856 = vld [vmem:[%s833 + $0xb0] sm:$0xff]
        %v857 = vld [vmem:[%s833 + $0xb8] sm:$0xff]
        %v858 = vld [vmem:[%s833 + $0xc0] sm:$0xff]
        %v859 = vld [vmem:[%s833 + $0xc8] sm:$0xff]
        %v860 = vld [vmem:[%s833 + $0xd0] sm:$0xff]
        %v861 = vld [vmem:[%s833 + $0xd8] sm:$0xff]
        %v862 = vld [vmem:[%s833 + $0xe0] sm:$0xff]
        %v863 = vld [vmem:[%s833 + $0xe8] sm:$0xff]
        %v864 = vld [vmem:[%s833 + $0xf0] sm:$0xff]
        %v865 = vld [vmem:[%s833 + $0xf8] sm:$0xff]
        %v866 = vrot.slane %v290, 7
        %v867 = vrot.slane %v291, 7
        %870 = vmatpush.msra.mxu0 %v849
        %871 = vmatpush.msra.mxu0 %v848
        %872 = vmatpush.msra.mxu0 %v847
        %873 = vmatpush.msra.mxu0 %v846
        %874 = vmatpush.msra.mxu0 %v845
        %875 = vmatpush.msra.mxu0 %v844
        %876 = vmatpush.msra.mxu0 %v843
        %877 = vmatpush.msra.mxu0 %v842
        %878 = vmatpush.msra.mxu0 %v841
        %879 = vmatpush.msra.mxu0 %v840
        %880 = vmatpush.msra.mxu0 %v839
        %881 = vmatpush.msra.mxu0 %v838
        %882 = vmatpush.msra.mxu0 %v837
        %883 = vmatpush.msra.mxu0 %v836
        %884 = vmatpush.msra.mxu0 %v835
        %885 = vmatpush.msra.mxu0 %v834
        %886 = vmatmul.f32.gmra.mxu0 %v866
        %v887 = vpop.f32.mrf.mxu0
        %v888 = vadd.f32 0.0, %v887
        %889 = vdwg.mxu0
        %890 = vmatpush.msra.mxu0 %v865
        %891 = vmatpush.msra.mxu0 %v864
        %892 = vmatpush.msra.mxu0 %v863
        %893 = vmatpush.msra.mxu0 %v862
        %894 = vmatpush.msra.mxu0 %v861
        %895 = vmatpush.msra.mxu0 %v860
        %896 = vmatpush.msra.mxu0 %v859
        %897 = vmatpush.msra.mxu0 %v858
        %898 = vmatpush.msra.mxu0 %v857
        %899 = vmatpush.msra.mxu0 %v856
        %900 = vmatpush.msra.mxu0 %v855
        %901 = vmatpush.msra.mxu0 %v854
        %902 = vmatpush.msra.mxu0 %v853
        %903 = vmatpush.msra.mxu0 %v852
        %904 = vmatpush.msra.mxu0 %v851
        %905 = vmatpush.msra.mxu0 %v850
        %906 = vmatmul.f32.gmra.mxu0 %v867
        %v907 = vpop.f32.mrf.mxu0
        %v908 = vadd.f32 %v888, %v907
        %909 = vdwg.mxu0
        %v910 = vadd.f32 %v832, %v908
        %v911 = vld [vmem:[%s4] sm:$0x1]
        %v912 = vadd.f32 %v910, %v911
        %vm913 = vcmask 73728
        %914 = vst.msk [vmem:[%s216] sm:$0x1] %vm913, %v912
        %s915 = sand.u32 %s137, 1
        %s916 = scalar_lea.sflag [#allocation3], %s915
        %s917 = sand.u32 %s137, 1
        %s918 = scalar_lea.vmem [#allocation2], %s917
        // Predicated region
        $region41: #{_fused_forward.1} parent=39 // pred_check
          %p919 = pneg %p147
        $region42: #{_fused_forward.1} parent=39 // pred_check_branch
          %921 = sbr.rel (%p919) target = $region44
        $region43: #{_fused_forward.1} parent=39 // pred_region
          %923 = vsyncadd %s916, 0
          %s924 = scalar_lea.hbm %s5, %s19
          %s926 = sshll.u32 %s918, 4
          %s927 = int_to_ptr.vmem [resolvable:$true] %s926
          %s928 = sshll.u32 %s924, 4
          %s929 = int_to_ptr.hbm [resolvable:$true] %s928
          %931 = dma.vmem_to_hbm [thread:$0]  %s927, 16, %s929, %s916
        $region44: #{_fused_forward.1} parent=39 // pred_fallthru
          _
      $region40: #{_fused_forward.1} parent=5 // pred_fallthru
        _
      %p932 = scmp.le.s32.totalorder 2, %s14
      // Predicated region
      $region45: #{_fused_forward.1} parent=5 // pred_check
        %p933 = pneg %p932
      $region46: #{_fused_forward.1} parent=5 // pred_check_branch
        %935 = sbr.rel (%p933) target = $region48
      $region47: #{_fused_forward.1} parent=5 // pred_region
        %s936 = ssub.s32 %s14, 2
        // Predicated region
        $region49: #{_fused_forward.1} parent=47 // pred_check
          %p937 = pneg %p153
        $region50: #{_fused_forward.1} parent=47 // pred_check_branch
          %939 = sbr.rel (%p937) target = $region52
        $region51: #{_fused_forward.1} parent=47 // pred_region
          %s940 = sand.u32 %s138, 1
          %s941 = scalar_lea.sflag [#allocation3], %s940
          %s942 = sand.u32 %s138, 1
          %s943 = scalar_lea.vmem [#allocation2], %s942
          %945 = dma.done %s941, 16
        $region52: #{_fused_forward.1} parent=47 // pred_fallthru
          _
      $region48: #{_fused_forward.1} parent=5 // pred_fallthru
        _
    $region6: #{_fused_forward.1} parent=1 // loop_footer
      %s18 = sadd.s32 1, %s14
    $region7: #{_fused_forward.1} parent=1 // loop_footer_branch
      %13 = sbr.rel target = $region3
    $region8: #{_fused_forward.1} parent=1 // loop_exit
      _
    %946 = vsyncpa [#allocation3], 1
    %s947 = scalar_lea.sflag [#allocation3], 1
    %948 = vsyncpa %s947, 1

</llo_original>
